<compile_context>
chip_gen: v5e
topology: v5e:2x2
jax: 0.10.0
libtpu: 0.0.40
codegen_flags: <defaults>
</compile_context>

<pallas_src>
import jax
import jax.numpy as jnp
from jax.experimental import pallas as pl
from jax.experimental.pallas import tpu as pltpu


def _focus_kernel(x_ref, w_ref, scale_ref, shift_ref, o_ref):
    """Fused 1x1 conv (no bias) + BatchNorm affine + SiLU on a (Bt, Cin, Pt) block.

    x_ref:     (Bt, Cin, Pt)  input slab (native dtype)
    w_ref:     (C2, Cin)      conv weight (resident for the whole grid)
    scale_ref: (C2, 1)        BN scale  = gamma / sqrt(var + eps)       (f32)
    shift_ref: (C2, 1)        BN shift  = beta - mean * scale           (f32)
    o_ref:     (Bt, C2, Pt)   output slab
    """
    w = w_ref[...]                      # (C2, Cin), native dtype (no slab upcast)
    scale = scale_ref[...]              # (C2, 1) f32
    shift = shift_ref[...]              # (C2, 1) f32

    for b in range(x_ref.shape[0]):     # static, small Bt
        # 1x1 conv == channel-mixing matmul, f32 accumulation on the MXU.
        y = jnp.dot(w, x_ref[b], preferred_element_type=jnp.float32)   # (C2, Pt)
        # BatchNorm (eval) as per-channel affine.
        y = y * scale + shift
        # SiLU activation.
        y = y * jax.nn.sigmoid(y)
        o_ref[b] = y.astype(o_ref.dtype)


def _choose_blocks(B, Cin, Cout, P, dtype_bytes):
    """Pick (Bt, Pt, P_pad) so each grid step moves ~1-2 MiB and stays lane-dense."""
    LANE = 128
    target = 2 * 1024 * 1024                       # ~2 MiB of in+out per step
    col_bytes = (Cin + Cout) * dtype_bytes         # in+out bytes per spatial column

    max_pt = max(LANE, (target // max(1, col_bytes)) // LANE * LANE)
    P_pad = ((P + LANE - 1) // LANE) * LANE
    if P_pad <= max_pt:
        Pt = P_pad
    else:
        Pt = max_pt
        P_pad = ((P + Pt - 1) // Pt) * Pt

    block_bytes = col_bytes * Pt
    bt_cap = max(1, target // max(1, block_bytes))
    Bt = 1
    for d in range(1, B + 1):                      # largest divisor of B within budget
        if B % d == 0 and d <= bt_cap:
            Bt = d

    # Keep >= 2 grid steps where possible so the "parallel" axis load-balances across
    # the two TensorCores on v7x.
    if (P_pad // Pt) == 1 and B >= 2:
        Bt = min(Bt, max(1, B // 2))
        while B % Bt:
            Bt -= 1
    return Bt, Pt, P_pad


def focus_forward(x, conv_w, bn_gamma, bn_beta, bn_mean, bn_var, bn_eps=1e-5):
    """Focus forward: space-to-depth(2) + Conv2d(4C->C2, k=1, bias=False) + BN(eval) + SiLU.

    x:        (B, C, H, W)
    conv_w:   (C2, 4C, 1, 1) or (C2, 4C)
    bn_*:     (C2,)
    returns:  (B, C2, H//2, W//2)
    """
    B, C, H, W = x.shape
    assert H % 2 == 0 and W % 2 == 0, "Focus needs even spatial dims"
    Cin = 4 * C
    if conv_w.ndim == 4:
        assert conv_w.shape[2] == 1 and conv_w.shape[3] == 1, "only k=1 supported"
        conv_w = conv_w.reshape(conv_w.shape[0], conv_w.shape[1])
    C2 = conv_w.shape[0]
    Ho, Wo = H // 2, W // 2
    P = Ho * Wo

    # Space-to-depth (same channel order as the torch.cat in Focus.forward).
    xs = jnp.concatenate(
        [x[:, :, ::2, ::2], x[:, :, 1::2, ::2], x[:, :, ::2, 1::2], x[:, :, 1::2, 1::2]],
        axis=1,
    ).reshape(B, Cin, P)

    dtype_bytes = jnp.dtype(x.dtype).itemsize
    Bt, Pt, P_pad = _choose_blocks(B, Cin, C2, P, dtype_bytes)
    if P_pad != P:
        # Lane-dense padding; padded columns are sliced off after the kernel.
        xs = jnp.pad(xs, ((0, 0), (0, 0), (0, P_pad - P)))

    # Fold BatchNorm (eval-mode running stats) into per-channel scale/shift.
    inv_std = 1.0 / jnp.sqrt(bn_var.astype(jnp.float32) + bn_eps)
    scale = (bn_gamma.astype(jnp.float32) * inv_std).reshape(C2, 1)
    shift = (bn_beta.astype(jnp.float32)
             - bn_mean.astype(jnp.float32) * bn_gamma.astype(jnp.float32) * inv_std).reshape(C2, 1)
    w = conv_w.astype(x.dtype)

    grid = (B // Bt, P_pad // Pt)
    cost = pl.CostEstimate(
        flops=2 * B * P_pad * Cin * C2,
        transcendentals=B * P_pad * C2,
        bytes_accessed=(B * (Cin + C2) * P_pad + Cin * C2) * dtype_bytes,
    )

    out = pl.pallas_call(
        _focus_kernel,
        out_shape=jax.ShapeDtypeStruct((B, C2, P_pad), x.dtype),
        grid_spec=pltpu.PrefetchScalarGridSpec(
            num_scalar_prefetch=0,
            grid=grid,
            in_specs=[
                pl.BlockSpec((Bt, Cin, Pt), lambda i, j: (i, 0, j)),   # input slab
                pl.BlockSpec((C2, Cin), lambda i, j: (0, 0)),          # weight (resident)
                pl.BlockSpec((C2, 1), lambda i, j: (0, 0)),            # BN scale
                pl.BlockSpec((C2, 1), lambda i, j: (0, 0)),            # BN shift
            ],
            out_specs=pl.BlockSpec((Bt, C2, Pt), lambda i, j: (i, 0, j)),
        ),
        compiler_params=pltpu.CompilerParams(
            dimension_semantics=("parallel", "parallel"),
            vmem_limit_bytes=32 * 1024 * 1024,
        ),
        cost_estimate=cost,
    )(xs, w, scale, shift)

    return out[:, :, :P].reshape(B, C2, Ho, Wo)


if __name__ == "__main__":
    key = jax.random.PRNGKey(0)
    kx, kw, kg, kb, km, kv = jax.random.split(key, 6)

    B, C, H, W = 2, 4, 16, 16          # input channels C -> space-to-depth gives 4C = 16
    C2 = 8                             # output channels of the Conv inside Focus
    eps = 1e-5

    x = jax.random.normal(kx, (B, C, H, W), dtype=jnp.float32)
    conv_w = jax.random.normal(kw, (C2, 4 * C, 1, 1), dtype=jnp.float32) * 0.1
    bn_gamma = 1.0 + 0.1 * jax.random.normal(kg, (C2,), dtype=jnp.float32)
    bn_beta = 0.1 * jax.random.normal(kb, (C2,), dtype=jnp.float32)
    bn_mean = 0.1 * jax.random.normal(km, (C2,), dtype=jnp.float32)
    bn_var = jnp.abs(1.0 + 0.1 * jax.random.normal(kv, (C2,), dtype=jnp.float32))

    out = focus_forward(x, conv_w, bn_gamma, bn_beta, bn_mean, bn_var, eps)
    out = jax.block_until_ready(out)

    # Pure-JAX reference of the Focus forward (space-to-depth + 1x1 conv + BN(eval) + SiLU).
    xs_ref = jnp.concatenate(
        [x[:, :, ::2, ::2], x[:, :, 1::2, ::2], x[:, :, ::2, 1::2], x[:, :, 1::2, 1::2]],
        axis=1,
    )
    w2 = conv_w.reshape(C2, 4 * C)
    conv = jnp.einsum("oc,bchw->bohw", w2, xs_ref)
    scale = bn_gamma / jnp.sqrt(bn_var + eps)
    shift = bn_beta - bn_mean * scale
    y = conv * scale[None, :, None, None] + shift[None, :, None, None]
    ref = y * jax.nn.sigmoid(y)

    assert out.shape == (B, C2, H // 2, W // 2), f"bad output shape {out.shape}"
    assert jnp.allclose(out, ref, atol=1e-5, rtol=1e-5), "mismatch vs reference"

    print("KERNEL_OK")
</pallas_src>

<mosaic_0001>
module attributes {stable_mosaic.version = 11 : i64} {
  func.func @_focus_kernel(%arg0: i32, %arg1: i32, %arg2: memref<1x16x128xf32, #tpu.memory_space<vmem>>, %arg3: memref<8x16xf32, #tpu.memory_space<vmem>>, %arg4: memref<8x1xf32, #tpu.memory_space<vmem>>, %arg5: memref<8x1xf32, #tpu.memory_space<vmem>>, %arg6: memref<1x8x128xf32, #tpu.memory_space<vmem>>) attributes {dimension_semantics = [#tpu.dimension_semantics<parallel>, #tpu.dimension_semantics<parallel>], iteration_bounds = array<i64: 2, 1>, scalar_prefetch = 0 : i64, scratch_operands = 0 : i64, tpu.core_type = #tpu.core_type<tc>, window_params = [{transform_indices = @transform_0, window_bounds = array<i64: 1, 16, 128>}, {pipeline_mode = #tpu.pipeline_mode<synchronous>, transform_indices = @transform_1, window_bounds = array<i64: 8, 16>}, {pipeline_mode = #tpu.pipeline_mode<synchronous>, transform_indices = @transform_2, window_bounds = array<i64: 8, 1>}, {pipeline_mode = #tpu.pipeline_mode<synchronous>, transform_indices = @transform_3, window_bounds = array<i64: 8, 1>}, {transform_indices = @transform_4, window_bounds = array<i64: 1, 8, 128>}]} {
    %c0 = arith.constant 0 : index
    %c0_0 = arith.constant 0 : index
    %0 = vector.load %arg3[%c0, %c0_0] : memref<8x16xf32, #tpu.memory_space<vmem>>, vector<8x16xf32>
    %c0_1 = arith.constant 0 : index
    %c0_2 = arith.constant 0 : index
    %1 = vector.load %arg4[%c0_1, %c0_2] : memref<8x1xf32, #tpu.memory_space<vmem>>, vector<8x1xf32>
    %c0_3 = arith.constant 0 : index
    %c0_4 = arith.constant 0 : index
    %2 = vector.load %arg5[%c0_3, %c0_4] : memref<8x1xf32, #tpu.memory_space<vmem>>, vector<8x1xf32>
    %c0_5 = arith.constant 0 : index
    %c0_6 = arith.constant 0 : index
    %c0_7 = arith.constant 0 : index
    %3 = vector.load %arg2[%c0_5, %c0_6, %c0_7] : memref<1x16x128xf32, #tpu.memory_space<vmem>>, vector<1x16x128xf32>
    %4 = vector.shape_cast %3 : vector<1x16x128xf32> to vector<16x128xf32>
    %cst = arith.constant dense<0.000000e+00> : vector<8x128xf32>
    %5 = tpu.matmul %0, %4, %cst {dimension_numbers = #tpu.dot_dimension_numbers<[1], [0], [0], [1], [0, 0, 1, 1], [], []>} : vector<8x16xf32>, vector<16x128xf32>, vector<8x128xf32> -> vector<8x128xf32>
    %6 = vector.broadcast %1 : vector<8x1xf32> to vector<8x128xf32>
    %7 = arith.mulf %5, %6 : vector<8x128xf32>
    %8 = vector.broadcast %2 : vector<8x1xf32> to vector<8x128xf32>
    %9 = arith.addf %7, %8 : vector<8x128xf32>
    %10 = arith.negf %9 : vector<8x128xf32>
    %11 = math.exp %10 : vector<8x128xf32>
    %cst_8 = arith.constant 1.000000e+00 : f32
    %12 = vector.broadcast %cst_8 : f32 to vector<8x128xf32>
    %13 = arith.addf %12, %11 : vector<8x128xf32>
    %14 = arith.divf %12, %13 : vector<8x128xf32>
    %15 = arith.mulf %9, %14 : vector<8x128xf32>
    %c0_9 = arith.constant 0 : index
    %c0_10 = arith.constant 0 : index
    %c0_11 = arith.constant 0 : index
    %16 = vector.load %arg6[%c0_9, %c0_10, %c0_11] : memref<1x8x128xf32, #tpu.memory_space<vmem>>, vector<1x8x128xf32>
    %17 = vector.shape_cast %16 : vector<1x8x128xf32> to vector<8x128xf32>
    %18 = vector.shape_cast %15 : vector<8x128xf32> to vector<1x8x128xf32>
    tpu.vector_store %arg6[%c0_9, %c0_10, %c0_11], %18 {strides = array<i32>} : memref<1x8x128xf32, #tpu.memory_space<vmem>>, vector<1x8x128xf32>,
    return
  }
  func.func @transform_0(%arg0: i32, %arg1: i32) -> (i32, i32, i32) {
    %c0_i32 = arith.constant 0 : i32
    %c0_i32_0 = arith.constant 0 : i32
    return %arg0, %c0_i32, %arg1 : i32, i32, i32
  }
  func.func @transform_1(%arg0: i32, %arg1: i32) -> (i32, i32) {
    %c0_i32 = arith.constant 0 : i32
    %c0_i32_0 = arith.constant 0 : i32
    %c0_i32_1 = arith.constant 0 : i32
    return %c0_i32, %c0_i32_0 : i32, i32
  }
  func.func @transform_2(%arg0: i32, %arg1: i32) -> (i32, i32) {
    %c0_i32 = arith.constant 0 : i32
    %c0_i32_0 = arith.constant 0 : i32
    %c0_i32_1 = arith.constant 0 : i32
    return %c0_i32, %c0_i32_0 : i32, i32
  }
  func.func @transform_3(%arg0: i32, %arg1: i32) -> (i32, i32) {
    %c0_i32 = arith.constant 0 : i32
    %c0_i32_0 = arith.constant 0 : i32
    %c0_i32_1 = arith.constant 0 : i32
    return %c0_i32, %c0_i32_0 : i32, i32
  }
  func.func @transform_4(%arg0: i32, %arg1: i32) -> (i32, i32, i32) {
    %c0_i32 = arith.constant 0 : i32
    %c0_i32_0 = arith.constant 0 : i32
    return %arg0, %c0_i32, %arg1 : i32, i32, i32
  }
}

</mosaic_0001>

<llo_original>
// kernel: tpu_custom_call.1
$region0: #{tpu_custom_call.1}
  #allocation0 [shape = 'u32[]', space=smem, size = 0x4, offset = 0x4, fixed_abs, tag = 'smem constant byte address 0x4 - core index']
  #allocation1 [shape = 'u32[72,128]{1,0:T(1,128)}', space=vmem, size = 0x9000, scoped, tag = 'internal scratch']
  %s0 = inlined_call_operand.hbm [shape: f32[2,16,128], index: 0, kind: input, shape index: {}]
  %s1 = inlined_call_operand.vmem [shape: f32[8,16], index: 1, kind: input, shape index: {}]
  %s2 = inlined_call_operand.vmem [shape: f32[8,1], index: 2, kind: input, shape index: {}]
  %s3 = inlined_call_operand.vmem [shape: f32[8,1], index: 3, kind: input, shape index: {}]
  %s4 = inlined_call_operand.hbm [shape: f32[2,8,128], index: 4, kind: output, shape index: {}]
  %s5 = sld [smem:[#allocation0]]
  $region53: #{tpu_custom_call.1} parent=0
    _
  %s7 = ssub.s32 1, %s5
  %s8 = scalar_select 0, %s7, %s5
  $region1: #{tpu_custom_call.1} parent=0
    #allocation2 [shape = 'u8[16384]{0}', space=vmem, size = 0x4000, scoped, tag = 'input window, operand 0']
    #allocation3 [shape = 's32[2]{0}', space=sflag, size = 0x8, scoped, tag = 'scoped memory for tpu_custom_call.1']
    #allocation4 [shape = 's32[2]{0}', space=sflag, size = 0x8, scoped, tag = 'scoped memory for tpu_custom_call.1']
    #allocation5 [shape = 'u8[8192]{0}', space=vmem, size = 0x2000, scoped, tag = 'output window, operand 0']
    %9 = vsyncpa [#allocation3], 0
    %s10 = scalar_lea.sflag [#allocation3], 1
    %11 = vsyncpa %s10, 0
    %12 = vsyncpa [#allocation4], 0
    %s13 = scalar_lea.sflag [#allocation4], 1
    %14 = vsyncpa %s13, 0
    loop: start=0, step=1, limit=4
    $region2: #{tpu_custom_call.1} parent=1 // loop_pre_header
      _
    $region3: #{tpu_custom_call.1} parent=1 // loop_header
      %s16 = sphi 0, %s20
      %p17 = scmp.ge.s32.totalorder %s16, 4
      %s23 = sphi 0, %s35
      %s24 = sphi 0, %s31
      %s25 = sphi 0, %s23
      %s26 = sphi 0, %s24
      %s27 = sphi 0, %s25
      %s28 = sphi 0, %s26
      %s40 = sphi 0, %s42
      %s43 = sphi 0, %s40
      %s44 = sphi 0, %s43
      %s60 = sphi 0, %s44
      %s64 = sphi 0, %s64
      %s66 = sphi 0, %s64
      %s67 = sphi 0, %s66
      %s81 = sphi 0, %s67
      %s85 = sphi 0, %s85
      %s87 = sphi 0, %s85
      %s88 = sphi 0, %s87
      %s102 = sphi 0, %s88
      %s106 = sphi 0, %s106
      %s108 = sphi 0, %s106
      %s109 = sphi 0, %s108
      %s123 = sphi 0, %s109
      %s131 = sphi 0, %s133
      %s134 = sphi 0, %s131
      %s135 = sphi 0, %s134
      %s151 = sphi 0, %s135
    $region4: #{tpu_custom_call.1} parent=1 // loop_header_branch
      %19 = sbr.rel (%p17) target = $region8
    $region5: #{tpu_custom_call.1} parent=1 // loop_body
      %s21 = ssub.s32 %s16, 1
      %s22 = ssub.s32 %s16, 2
      %s29 = sadd.s32 1, %s24
      %p30 = scmp.ge.s32.totalorder %s29, 1
      %s31 = scalar_select %p30, 0, %s29
      %s32 = sadd.s32 1, %s23
      %s33 = scalar_select %p30, %s32, %s23
      %p34 = scmp.ge.s32.totalorder %s33, 2
      %s35 = scalar_select %p34, 0, %s33
      %s36 = ssub.s32 %s23, %s35
      %s37 = ssub.s32 %s24, %s31
      %s38 = sor.u32 %s36, %s37
      %p39 = scmp.eq.s32.totalorder %s38, 0
      %s41 = sadd.s32 %s40, 1
      %s42 = scalar_select %p39, %s40, %s41
      %p45 = pneg %p39
      %p46 = scmp.eq.s32.totalorder %s16, 1
      %p47 = por %p45, %p46
      %p48 = scmp.ne.s32.totalorder %s40, %s43
      %p49 = scmp.eq.s32.totalorder %s16, 0
      %p50 = por %p48, %p49
      %p51 = scmp.ne.s32.totalorder %s40, %s43
      %p52 = scmp.eq.s32.totalorder %s21, 1
      %p53 = por %p51, %p52
      %p54 = scmp.ne.s32.totalorder %s43, %s44
      %p55 = scmp.eq.s32.totalorder %s21, 0
      %p56 = por %p54, %p55
      %p57 = scmp.ne.s32.totalorder %s43, %s44
      %p58 = scmp.eq.s32.totalorder %s22, 1
      %p59 = por %p57, %p58
      %p61 = scmp.ne.s32.totalorder %s44, %s60
      %p62 = scmp.eq.s32.totalorder %s22, 0
      %p63 = por %p61, %p62
      %s65 = sadd.s32 %s64, 1
      %p68 = scmp.eq.s32.totalorder %s16, 1
      %p69 = scmp.ne.s32.totalorder %s64, %s66
      %p70 = scmp.eq.s32.totalorder %s16, 0
      %p71 = por %p69, %p70
      %p72 = scmp.ne.s32.totalorder %s64, %s66
      %p73 = scmp.eq.s32.totalorder %s21, 1
      %p74 = por %p72, %p73
      %p75 = scmp.ne.s32.totalorder %s66, %s67
      %p76 = scmp.eq.s32.totalorder %s21, 0
      %p77 = por %p75, %p76
      %p78 = scmp.ne.s32.totalorder %s66, %s67
      %p79 = scmp.eq.s32.totalorder %s22, 1
      %p80 = por %p78, %p79
      %p82 = scmp.ne.s32.totalorder %s67, %s81
      %p83 = scmp.eq.s32.totalorder %s22, 0
      %p84 = por %p82, %p83
      %s86 = sadd.s32 %s85, 1
      %p89 = scmp.eq.s32.totalorder %s16, 1
      %p90 = scmp.ne.s32.totalorder %s85, %s87
      %p91 = scmp.eq.s32.totalorder %s16, 0
      %p92 = por %p90, %p91
      %p93 = scmp.ne.s32.totalorder %s85, %s87
      %p94 = scmp.eq.s32.totalorder %s21, 1
      %p95 = por %p93, %p94
      %p96 = scmp.ne.s32.totalorder %s87, %s88
      %p97 = scmp.eq.s32.totalorder %s21, 0
      %p98 = por %p96, %p97
      %p99 = scmp.ne.s32.totalorder %s87, %s88
      %p100 = scmp.eq.s32.totalorder %s22, 1
      %p101 = por %p99, %p100
      %p103 = scmp.ne.s32.totalorder %s88, %s102
      %p104 = scmp.eq.s32.totalorder %s22, 0
      %p105 = por %p103, %p104
      %s107 = sadd.s32 %s106, 1
      %p110 = scmp.eq.s32.totalorder %s16, 1
      %p111 = scmp.ne.s32.totalorder %s106, %s108
      %p112 = scmp.eq.s32.totalorder %s16, 0
      %p113 = por %p111, %p112
      %p114 = scmp.ne.s32.totalorder %s106, %s108
      %p115 = scmp.eq.s32.totalorder %s21, 1
      %p116 = por %p114, %p115
      %p117 = scmp.ne.s32.totalorder %s108, %s109
      %p118 = scmp.eq.s32.totalorder %s21, 0
      %p119 = por %p117, %p118
      %p120 = scmp.ne.s32.totalorder %s108, %s109
      %p121 = scmp.eq.s32.totalorder %s22, 1
      %p122 = por %p120, %p121
      %p124 = scmp.ne.s32.totalorder %s109, %s123
      %p125 = scmp.eq.s32.totalorder %s22, 0
      %p126 = por %p124, %p125
      %s127 = ssub.s32 %s23, %s35
      %s128 = ssub.s32 %s24, %s31
      %s129 = sor.u32 %s127, %s128
      %p130 = scmp.eq.s32.totalorder %s129, 0
      %s132 = sadd.s32 %s131, 1
      %s133 = scalar_select %p130, %s131, %s132
      %p136 = pneg %p130
      %p137 = scmp.eq.s32.totalorder %s16, 1
      %p138 = por %p136, %p137
      %p139 = scmp.ne.s32.totalorder %s131, %s134
      %p140 = scmp.eq.s32.totalorder %s16, 0
      %p141 = por %p139, %p140
      %p142 = scmp.ne.s32.totalorder %s131, %s134
      %p143 = scmp.eq.s32.totalorder %s21, 1
      %p144 = por %p142, %p143
      %p145 = scmp.ne.s32.totalorder %s134, %s135
      %p146 = scmp.eq.s32.totalorder %s21, 0
      %p147 = por %p145, %p146
      %p148 = scmp.ne.s32.totalorder %s134, %s135
      %p149 = scmp.eq.s32.totalorder %s22, 1
      %p150 = por %p148, %p149
      %p152 = scmp.ne.s32.totalorder %s135, %s151
      %p153 = scmp.eq.s32.totalorder %s22, 0
      %p154 = por %p152, %p153
      %p155 = scmp.le.s32.totalorder 1, %s16
      %p156 = scmp.lt.s32.totalorder %s16, 3
      %p157 = pnand %p155, %p156
      %p158 = pneg %p157
      // Predicated region
      $region9: #{tpu_custom_call.1} parent=5 // pred_check
        _
      $region10: #{tpu_custom_call.1} parent=5 // pred_check_branch
        %160 = sbr.rel (%p157) target = $region12
      $region11: #{tpu_custom_call.1} parent=5 // pred_region
        %s161 = ssub.s32 %s16, 1
        // Predicated region
        $region13: #{tpu_custom_call.1} parent=11 // pred_check
          %p162 = pneg %p77
        $region14: #{tpu_custom_call.1} parent=11 // pred_check_branch
          %164 = sbr.rel (%p162) target = $region16
        $region15: #{tpu_custom_call.1} parent=11 // pred_region
          _
        $region16: #{tpu_custom_call.1} parent=11 // pred_fallthru
          _
        // Predicated region
        $region17: #{tpu_custom_call.1} parent=11 // pred_check
          %p165 = pneg %p98
        $region18: #{tpu_custom_call.1} parent=11 // pred_check_branch
          %167 = sbr.rel (%p165) target = $region20
        $region19: #{tpu_custom_call.1} parent=11 // pred_region
          _
        $region20: #{tpu_custom_call.1} parent=11 // pred_fallthru
          _
        // Predicated region
        $region21: #{tpu_custom_call.1} parent=11 // pred_check
          %p168 = pneg %p119
        $region22: #{tpu_custom_call.1} parent=11 // pred_check_branch
          %170 = sbr.rel (%p168) target = $region24
        $region23: #{tpu_custom_call.1} parent=11 // pred_region
          _
        $region24: #{tpu_custom_call.1} parent=11 // pred_fallthru
          _
      $region12: #{tpu_custom_call.1} parent=5 // pred_fallthru
        _
      %p171 = scmp.lt.s32.totalorder %s16, 2
      // Predicated region
      $region25: #{tpu_custom_call.1} parent=5 // pred_check
        %p172 = pneg %p171
      $region26: #{tpu_custom_call.1} parent=5 // pred_check_branch
        %174 = sbr.rel (%p172) target = $region28
      $region27: #{tpu_custom_call.1} parent=5 // pred_region
        // Predicated region
        $region29: #{tpu_custom_call.1} parent=27 // pred_check
          %p175 = pneg %p50
        $region30: #{tpu_custom_call.1} parent=27 // pred_check_branch
          %177 = sbr.rel (%p175) target = $region32
        $region31: #{tpu_custom_call.1} parent=27 // pred_region
          %s178 = sand.u32 %s40, 1
          %s179 = scalar_lea.sflag [#allocation3], %s178
          %s180 = sand.u32 %s40, 1
          %s181 = smul.addr %s180, 16
          %s182 = scalar_lea.vmem [#allocation2], %s181
          %184 = vsyncadd %s179, 0
          %s185 = smul.addr %s23, 2
          %s186 = sadd.s32 %s24, %s185
          %s187 = smul.addr %s186, 8
          %s188 = scalar_lea.hbm %s0, %s187
          %s189 = sshll.u32 %s188, 4
          %s190 = int_to_ptr.hbm [resolvable:$true] %s189
          %s191 = sshll.u32 %s182, 4
          %s192 = int_to_ptr.vmem [resolvable:$true] %s191
          %197 = dma.hbm_to_vmem [thread:$0]  %s190, 256, %s192, %s179, 128, 128, 8
        $region32: #{tpu_custom_call.1} parent=27 // pred_fallthru
          _
      $region28: #{tpu_custom_call.1} parent=5 // pred_fallthru
        _
      %p198 = scmp.le.s32.totalorder 1, %s16
      %p199 = scmp.lt.s32.totalorder %s16, 3
      %p200 = pnand %p198, %p199
      %p201 = pneg %p200
      // Predicated region
      $region33: #{tpu_custom_call.1} parent=5 // pred_check
        _
      $region34: #{tpu_custom_call.1} parent=5 // pred_check_branch
        %203 = sbr.rel (%p200) target = $region36
      $region35: #{tpu_custom_call.1} parent=5 // pred_region
        %s204 = ssub.s32 %s16, 1
        %s205 = sand.u32 %s43, 1
        %s206 = scalar_lea.sflag [#allocation3], %s205
        %s207 = sand.u32 %s43, 1
        %s208 = smul.addr %s207, 16
        %s209 = scalar_lea.vmem [#allocation2], %s208
        // Predicated region
        $region37: #{tpu_custom_call.1} parent=35 // pred_check
          %p210 = pneg %p56
        $region38: #{tpu_custom_call.1} parent=35 // pred_check_branch
          %212 = sbr.rel (%p210) target = $region40
        $region39: #{tpu_custom_call.1} parent=35 // pred_region
          %214 = dma.done %s206, 256
        $region40: #{tpu_custom_call.1} parent=35 // pred_fallthru
          _
        %s215 = sand.u32 %s43, 1
        %s216 = scalar_lea.sflag [#allocation3], %s215
        %s217 = sand.u32 %s43, 1
        %s218 = smul.addr %s217, 16
        %s219 = scalar_lea.vmem [#allocation2], %s218
        %p220 = pneg %p56
        %p221 = pneg %p53
        %p222 = pneg %p77
        %p223 = pneg %p74
        %p224 = pneg %p98
        %p225 = pneg %p95
        %p226 = pneg %p119
        %p227 = pneg %p116
        %p228 = pneg %p147
        %p229 = pneg %p144
        %s230 = sand.u32 %s134, 1
        %s231 = scalar_lea.sflag [#allocation4], %s230
        %s232 = sand.u32 %s134, 1
        %s233 = smul.addr %s232, 8
        %s234 = scalar_lea.vmem [#allocation5], %s233
        %v235 = vld [vmem:[%s1] sm:$0xff]
        %v236 = vld [vmem:[%s2] sm:$0xff]
        %v237 = vld [vmem:[%s3] sm:$0xff]
        %v238 = vld [vmem:[%s209] sm:$0xff]
        %v239 = vld [vmem:[%s209 + $0x8] sm:$0xff]
        %vm240 = vcmask 130048
        %v242 = vsel %vm240, %v235, 0
        %244 = vmatpush.msra.mxu0 0.0
        %245 = vmatpush.msra.mxu0 0.0
        %246 = vmatpush.msra.mxu0 0.0
        %247 = vmatpush.msra.mxu0 0.0
        %248 = vmatpush.msra.mxu0 0.0
        %249 = vmatpush.msra.mxu0 0.0
        %250 = vmatpush.msra.mxu0 0.0
        %251 = vmatpush.msra.mxu0 0.0
        %252 = vmatpush.msra.mxu0 0.0
        %253 = vmatpush.msra.mxu0 0.0
        %254 = vmatpush.msra.mxu0 0.0
        %255 = vmatpush.msra.mxu0 0.0
        %256 = vmatpush.msra.mxu0 0.0
        %257 = vmatpush.msra.mxu0 0.0
        %258 = vmatpush.msra.mxu0 %v239
        %259 = vmatpush.msra.mxu0 %v238
        %260 = vmatmul.f32.gmra.mxu0 %v242
        %v261 = vpop.f32.mrf.mxu0
        %v262 = vadd.f32 0.0, %v261
        %263 = vdwg.mxu0
        %265 = vset.pattern.permute.xlu0 0
        %266 = vperm.xlu0 %265, %v236
        %v267 = vpop.permute.xlu0 %266
        %v269 = vmul.f32 %v262, %v267
        %271 = vset.pattern.permute.xlu0 0
        %272 = vperm.xlu0 %271, %v237
        %v273 = vpop.permute.xlu0 %272
        %v275 = vadd.f32 %v269, %v273
        %v276 = vxor.u32 %v275, 2147483648
        %v277 = vmul.f32 %v276, 1.442695
        %v278 = vpow.pop %v277
        %v279 = vadd.f32 %v278, 1.0
        %v280 = vrcp.pop %v279
        %v281 = vmul.f32 %v279, %v280
        %v282 = vsub.f32 1.0, %v281
        %v283 = vmul.f32 %v280, %v282
        %v284 = vadd.f32 %v280, %v283
        %vm285 = vweird.f32 %v279
        %vm286 = vweird.f32 %v280
        %vm287 = vmor %vm285, %vm286
        %v288 = vsel %vm287, %v280, %v284
        %v289 = vand.u32 2147483647, %v279
        %vm290 = vcmp.eq.f32.partialorder %v289, 8.507059e+37
        %v291 = vand.u32 %v279, 2147483648
        %v292 = vor.u32 1.1754944e-38, %v291
        %v293 = vsel %vm290, %v292, %v288
        %v294 = vmul.f32 1.0, %v293
        %v295 = vmul.f32 %v275, %v294
        %296 = vst [vmem:[%s234] sm:$0xff] %v295
        %s297 = sand.u32 %s134, 1
        %s298 = scalar_lea.sflag [#allocation4], %s297
        %s299 = sand.u32 %s134, 1
        %s300 = smul.addr %s299, 8
        %s301 = scalar_lea.vmem [#allocation5], %s300
        // Predicated region
        $region41: #{tpu_custom_call.1} parent=35 // pred_check
          %p302 = pneg %p144
        $region42: #{tpu_custom_call.1} parent=35 // pred_check_branch
          %304 = sbr.rel (%p302) target = $region44
        $region43: #{tpu_custom_call.1} parent=35 // pred_region
          %306 = vsyncadd %s298, 0
          %s307 = sadd.s32 %s26, %s25
          %s308 = smul.addr %s307, 8
          %s309 = scalar_lea.hbm %s4, %s308
          %s311 = sshll.u32 %s301, 4
          %s312 = int_to_ptr.vmem [resolvable:$true] %s311
          %s313 = sshll.u32 %s309, 4
          %s314 = int_to_ptr.hbm [resolvable:$true] %s313
          %316 = dma.vmem_to_hbm [thread:$0]  %s312, 128, %s314, %s298
        $region44: #{tpu_custom_call.1} parent=35 // pred_fallthru
          _
      $region36: #{tpu_custom_call.1} parent=5 // pred_fallthru
        _
      %p317 = scmp.le.s32.totalorder 2, %s16
      // Predicated region
      $region45: #{tpu_custom_call.1} parent=5 // pred_check
        %p318 = pneg %p317
      $region46: #{tpu_custom_call.1} parent=5 // pred_check_branch
        %320 = sbr.rel (%p318) target = $region48
      $region47: #{tpu_custom_call.1} parent=5 // pred_region
        %s321 = ssub.s32 %s16, 2
        // Predicated region
        $region49: #{tpu_custom_call.1} parent=47 // pred_check
          %p322 = pneg %p150
        $region50: #{tpu_custom_call.1} parent=47 // pred_check_branch
          %324 = sbr.rel (%p322) target = $region52
        $region51: #{tpu_custom_call.1} parent=47 // pred_region
          %s325 = sand.u32 %s135, 1
          %s326 = scalar_lea.sflag [#allocation4], %s325
          %s327 = sand.u32 %s135, 1
          %s328 = smul.addr %s327, 8
          %s329 = scalar_lea.vmem [#allocation5], %s328
          %331 = dma.done %s326, 128
        $region52: #{tpu_custom_call.1} parent=47 // pred_fallthru
          _
      $region48: #{tpu_custom_call.1} parent=5 // pred_fallthru
        _
    $region6: #{tpu_custom_call.1} parent=1 // loop_footer
      %s20 = sadd.s32 1, %s16
    $region7: #{tpu_custom_call.1} parent=1 // loop_footer_branch
      %15 = sbr.rel target = $region3
    $region8: #{tpu_custom_call.1} parent=1 // loop_exit
      _
    %332 = vsyncpa [#allocation3], 1
    %s333 = scalar_lea.sflag [#allocation3], 1
    %334 = vsyncpa %s333, 1
    %335 = vsyncpa [#allocation4], 1
    %s336 = scalar_lea.sflag [#allocation4], 1
    %337 = vsyncpa %s336, 1

</llo_original>
